<compile_context>
chip_gen: v6e
topology: v6e:2x2x1
jax: 0.10.0
libtpu: 0.0.40
codegen_flags: <defaults>
</compile_context>

<pallas_src>
import functools

import jax
import jax.numpy as jnp
from jax.experimental import pallas as pl
from jax.experimental.pallas import tpu as pltpu

_LANE = 128
_EPS_LN = 1e-5     # nn.LayerNorm default
_EPS_L2 = 1e-12    # F.normalize default


def _round_up(x, m):
    return ((x + m - 1) // m) * m


def _fused_kernel(x_ref, w1_ref, b1_ref, g1_ref, be1_ref,
                  w2_ref, b2_ref, g2_ref, be2_ref,
                  sbp_ref, dbp_ref,
                  *, hidden_dim, branch_dim, hidden_pad, branch_pad):
    """One batch-tile grid step, both branches fused.

    Ref shapes:
      x   : [tb, D_in]                      f32
      w1  : [D_in, 2*Hpad]   b1/g1/be1 : [1, 2*Hpad]   (sbp half | dbp half)
      w2  : [2, Hpad, Bpad]  b2/g2/be2 : [1, 2*Bpad]
      sbp/dbp out : [tb, branch_dim]        (unpadded, lane-masked store)
    Padded parameter rows/cols are zero, so padded activation columns stay exactly
    zero; LayerNorm stats use an exact analytic correction for the padded columns.
    """
    x = x_ref[...]

    # ---- fused Linear(in -> hidden) for BOTH branches: one MXU pass --------------
    h = jnp.dot(x, w1_ref[...], preferred_element_type=jnp.float32) + b1_ref[...]

    pad_h = float(hidden_pad - hidden_dim)
    pad_b = float(branch_pad - branch_dim)

    def layer_norm(v, gamma, beta, real_dim, pad_count):
        # Padded columns of v are exactly 0 -> the full-width sum IS the real sum.
        inv = 1.0 / real_dim
        mu = jnp.sum(v, axis=-1, keepdims=True) * inv
        c = v - mu                                     # padded cols become -mu
        ssq = jnp.sum(c * c, axis=-1, keepdims=True)
        var = (ssq - pad_count * (mu * mu)) * inv      # exact correction, no mask
        # gamma/beta are zero-padded -> padded output columns stay exactly 0.
        return c * jax.lax.rsqrt(var + _EPS_LN) * gamma + beta

    out_refs = (sbp_ref, dbp_ref)
    for br in range(2):
        hs = slice(br * hidden_pad, (br + 1) * hidden_pad)   # lane-aligned slices
        bs = slice(br * branch_pad, (br + 1) * branch_pad)

        # ---- LayerNorm(hidden_dim) + ReLU (Dropout is identity in eval mode) -----
        hb = layer_norm(h[:, hs], g1_ref[:, hs], be1_ref[:, hs], hidden_dim, pad_h)
        hb = jnp.maximum(hb, 0.0)

        # ---- Linear(hidden -> branch) + bias (MXU) --------------------------------
        z = jnp.dot(hb, w2_ref[br], preferred_element_type=jnp.float32) + b2_ref[:, bs]

        # ---- LayerNorm(branch_dim) -------------------------------------------------
        z = layer_norm(z, g2_ref[:, bs], be2_ref[:, bs], branch_dim, pad_b)

        # ---- L2 normalize along features: rsqrt-mul, clamp like F.normalize --------
        ssq = jnp.sum(z * z, axis=-1, keepdims=True)
        inv_norm = jax.lax.rsqrt(jnp.maximum(ssq, _EPS_L2 * _EPS_L2))
        out_refs[br][...] = (z * inv_norm)[:, :branch_dim]


def _pack_params(sbp_params, dbp_params, hidden_pad, branch_pad):
    """Concat the two branches along lanes (zero-padded to 128-lane multiples)."""
    def cat_rows(ps, width):                    # ps: [1, dim] each -> [1, 2*width]
        return jnp.concatenate(
            [jnp.pad(p, ((0, 0), (0, width - p.shape[1]))) for p in ps], axis=-1)

    w1s, b1s, g1s, be1s, w2s, b2s, g2s, be2s = sbp_params
    w1d, b1d, g1d, be1d, w2d, b2d, g2d, be2d = dbp_params

    w1 = jnp.concatenate(
        [jnp.pad(w, ((0, 0), (0, hidden_pad - w.shape[1]))) for w in (w1s, w1d)],
        axis=-1)                                                    # [D_in, 2*Hpad]
    b1 = cat_rows((b1s, b1d), hidden_pad)                           # [1, 2*Hpad]
    g1 = cat_rows((g1s, g1d), hidden_pad)
    be1 = cat_rows((be1s, be1d), hidden_pad)
    w2 = jnp.stack(
        [jnp.pad(w, ((0, hidden_pad - w.shape[0]), (0, branch_pad - w.shape[1])))
         for w in (w2s, w2d)], axis=0)                              # [2, Hpad, Bpad]
    b2 = cat_rows((b2s, b2d), branch_pad)                           # [1, 2*Bpad]
    g2 = cat_rows((g2s, g2d), branch_pad)
    be2 = cat_rows((be2s, be2d), branch_pad)
    return w1, b1, g1, be1, w2, b2, g2, be2


@jax.jit
def branch_representation_encoder(features, sbp_params, dbp_params):
    """Full module forward: returns (sbp_norm, dbp_norm), each [B, branch_dim]."""
    B, input_dim = features.shape
    hidden_dim = sbp_params[0].shape[1]
    branch_dim = sbp_params[4].shape[1]
    hidden_pad = _round_up(hidden_dim, _LANE)
    branch_pad = _round_up(branch_dim, _LANE)

    # ---- batch tile: big (<=2048 rows), multiple of 8, prefer a divisor of B ------
    tb_cap = 2048
    b8 = _round_up(B, 8)
    if b8 <= tb_cap:
        tb = b8
    else:
        tb = 0
        for cand in range(tb_cap, 7, -8):       # largest multiple-of-8 divisor of B
            if B % cand == 0:
                tb = cand
                break
        if tb == 0:
            tb = tb_cap
    b_pad = _round_up(B, tb)
    # v7x: expose >= 2 parallel grid steps so both TensorCores get work.
    if b_pad // tb < 2 and tb >= 16 and (tb // 2) % 8 == 0 and b_pad % (tb // 2) == 0:
        tb //= 2

    x = features
    if b_pad != B:
        x = jnp.pad(x, ((0, b_pad - B), (0, 0)))

    w1, b1, g1, be1, w2, b2, g2, be2 = _pack_params(
        sbp_params, dbp_params, hidden_pad, branch_pad)

    grid = (b_pad // tb,)

    def resident(ndim):                         # constant block index -> DMA'd once
        return lambda i: (0,) * ndim

    in_specs = [
        pl.BlockSpec((tb, input_dim), lambda i: (i, 0)),
        pl.BlockSpec(w1.shape, resident(2)),
        pl.BlockSpec(b1.shape, resident(2)),
        pl.BlockSpec(g1.shape, resident(2)),
        pl.BlockSpec(be1.shape, resident(2)),
        pl.BlockSpec(w2.shape, resident(3)),
        pl.BlockSpec(b2.shape, resident(2)),
        pl.BlockSpec(g2.shape, resident(2)),
        pl.BlockSpec(be2.shape, resident(2)),
    ]
    out_specs = [
        pl.BlockSpec((tb, branch_dim), lambda i: (i, 0)),
        pl.BlockSpec((tb, branch_dim), lambda i: (i, 0)),
    ]

    flops = 2 * 2 * b_pad * (input_dim * hidden_dim + hidden_dim * branch_dim)
    transcendentals = 2 * 3 * b_pad             # 2 LN rsqrt + 1 L2 rsqrt / row / branch
    param_elems = (input_dim * 2 * hidden_pad + 3 * 2 * hidden_pad
                   + 2 * hidden_pad * branch_pad + 3 * 2 * branch_pad)
    bytes_accessed = 4 * (b_pad * input_dim + 2 * b_pad * branch_dim + param_elems)

    sbp, dbp = pl.pallas_call(
        functools.partial(_fused_kernel,
                          hidden_dim=hidden_dim, branch_dim=branch_dim,
                          hidden_pad=hidden_pad, branch_pad=branch_pad),
        out_shape=(jax.ShapeDtypeStruct((b_pad, branch_dim), jnp.float32),
                   jax.ShapeDtypeStruct((b_pad, branch_dim), jnp.float32)),
        grid_spec=pltpu.PrefetchScalarGridSpec(
            num_scalar_prefetch=0,
            grid=grid,
            in_specs=in_specs,
            out_specs=out_specs,
        ),
        compiler_params=pltpu.CompilerParams(
            dimension_semantics=("parallel",)),
        cost_estimate=pl.CostEstimate(
            flops=flops, transcendentals=transcendentals,
            bytes_accessed=bytes_accessed),
    )(x, w1, b1, g1, be1, w2, b2, g2, be2)

    if b_pad != B:
        sbp = sbp[:B]
        dbp = dbp[:B]
    return sbp, dbp


def init_branch_params(key, input_dim, hidden_dim, branch_dim):
    """Deterministic synthetic parameters (shapes match the PyTorch module).

    Linear weights stored as [in, out] (transposed vs. torch's [out, in]);
    biases / LayerNorm affine params kept 2-D as [1, dim]."""
    k1, k2, k3, k4 = jax.random.split(key, 4)
    w1 = jax.random.normal(k1, (input_dim, hidden_dim), jnp.float32) * 0.1
    b1 = jax.random.normal(k2, (1, hidden_dim), jnp.float32) * 0.05
    g1 = jnp.ones((1, hidden_dim), jnp.float32)           # LayerNorm weight
    be1 = jnp.zeros((1, hidden_dim), jnp.float32)         # LayerNorm bias
    w2 = jax.random.normal(k3, (hidden_dim, branch_dim), jnp.float32) * 0.1
    b2 = jax.random.normal(k4, (1, branch_dim), jnp.float32) * 0.05
    g2 = jnp.ones((1, branch_dim), jnp.float32)
    be2 = jnp.zeros((1, branch_dim), jnp.float32)
    return (w1, b1, g1, be1, w2, b2, g2, be2)


def _reference_branch(x, params):
    """Pure-JAX reference (eval-mode PyTorch semantics)."""
    w1, b1, g1, be1, w2, b2, g2, be2 = params
    h = x @ w1 + b1
    mu = h.mean(-1, keepdims=True)
    var = ((h - mu) ** 2).mean(-1, keepdims=True)
    h = (h - mu) / jnp.sqrt(var + _EPS_LN) * g1 + be1
    h = jnp.maximum(h, 0.0)
    z = h @ w2 + b2
    mu2 = z.mean(-1, keepdims=True)
    var2 = ((z - mu2) ** 2).mean(-1, keepdims=True)
    z = (z - mu2) / jnp.sqrt(var2 + _EPS_LN) * g2 + be2
    n = jnp.sqrt((z * z).sum(-1, keepdims=True))
    return z / jnp.maximum(n, _EPS_L2)


if __name__ == "__main__":
    # Small shapes consistent with the module defaults.
    B, input_dim, hidden_dim, branch_dim = 8, 32, 32, 16

    key = jax.random.PRNGKey(0)
    kx, ks, kd = jax.random.split(key, 3)
    features = jax.random.normal(kx, (B, input_dim), jnp.float32)

    sbp_params = init_branch_params(ks, input_dim, hidden_dim, branch_dim)
    dbp_params = init_branch_params(kd, input_dim, hidden_dim, branch_dim)

    sbp_out, dbp_out = branch_representation_encoder(features, sbp_params, dbp_params)
    jax.block_until_ready((sbp_out, dbp_out))

    # Correctness check vs. pure-JAX reference.
    sbp_ref = _reference_branch(features, sbp_params)
    dbp_ref = _reference_branch(features, dbp_params)
    assert sbp_out.shape == (B, branch_dim) and dbp_out.shape == (B, branch_dim)
    assert jnp.allclose(sbp_out, sbp_ref, atol=1e-5, rtol=1e-5)
    assert jnp.allclose(dbp_out, dbp_ref, atol=1e-5, rtol=1e-5)

    print("KERNEL_OK")
</pallas_src>

<mosaic_0001>
module attributes {stable_mosaic.version = 11 : i64} {
  func.func @_fused_kernel(%arg0: i32, %arg1: memref<8x32xf32, #tpu.memory_space<vmem>>, %arg2: memref<32x256xf32, #tpu.memory_space<vmem>>, %arg3: memref<1x256xf32, #tpu.memory_space<vmem>>, %arg4: memref<1x256xf32, #tpu.memory_space<vmem>>, %arg5: memref<1x256xf32, #tpu.memory_space<vmem>>, %arg6: memref<2x128x128xf32, #tpu.memory_space<vmem>>, %arg7: memref<1x256xf32, #tpu.memory_space<vmem>>, %arg8: memref<1x256xf32, #tpu.memory_space<vmem>>, %arg9: memref<1x256xf32, #tpu.memory_space<vmem>>, %arg10: memref<8x16xf32, #tpu.memory_space<vmem>>, %arg11: memref<8x16xf32, #tpu.memory_space<vmem>>) attributes {dimension_semantics = [#tpu.dimension_semantics<parallel>], iteration_bounds = array<i64: 1>, scalar_prefetch = 0 : i64, scratch_operands = 0 : i64, tpu.core_type = #tpu.core_type<tc>, window_params = [{transform_indices = @transform_0, window_bounds = array<i64: 8, 32>}, {pipeline_mode = #tpu.pipeline_mode<synchronous>, transform_indices = @transform_1, window_bounds = array<i64: 32, 256>}, {pipeline_mode = #tpu.pipeline_mode<synchronous>, transform_indices = @transform_2, window_bounds = array<i64: 1, 256>}, {pipeline_mode = #tpu.pipeline_mode<synchronous>, transform_indices = @transform_3, window_bounds = array<i64: 1, 256>}, {pipeline_mode = #tpu.pipeline_mode<synchronous>, transform_indices = @transform_4, window_bounds = array<i64: 1, 256>}, {pipeline_mode = #tpu.pipeline_mode<synchronous>, transform_indices = @transform_5, window_bounds = array<i64: 2, 128, 128>}, {pipeline_mode = #tpu.pipeline_mode<synchronous>, transform_indices = @transform_6, window_bounds = array<i64: 1, 256>}, {pipeline_mode = #tpu.pipeline_mode<synchronous>, transform_indices = @transform_7, window_bounds = array<i64: 1, 256>}, {pipeline_mode = #tpu.pipeline_mode<synchronous>, transform_indices = @transform_8, window_bounds = array<i64: 1, 256>}, {transform_indices = @transform_9, window_bounds = array<i64: 8, 16>}, {transform_indices = @transform_10, window_bounds = array<i64: 8, 16>}]} {
    %c0 = arith.constant 0 : index
    %c0_0 = arith.constant 0 : index
    %0 = vector.load %arg1[%c0, %c0_0] : memref<8x32xf32, #tpu.memory_space<vmem>>, vector<8x32xf32>
    %c0_1 = arith.constant 0 : index
    %c0_2 = arith.constant 0 : index
    %1 = vector.load %arg2[%c0_1, %c0_2] : memref<32x256xf32, #tpu.memory_space<vmem>>, vector<32x256xf32>
    %cst = arith.constant dense<0.000000e+00> : vector<8x256xf32>
    %2 = tpu.matmul %0, %1, %cst {dimension_numbers = #tpu.dot_dimension_numbers<[1], [0], [0], [1], [0, 0, 1, 1], [], []>} : vector<8x32xf32>, vector<32x256xf32>, vector<8x256xf32> -> vector<8x256xf32>
    %c0_3 = arith.constant 0 : index
    %c0_4 = arith.constant 0 : index
    %3 = vector.load %arg3[%c0_3, %c0_4] : memref<1x256xf32, #tpu.memory_space<vmem>>, vector<1x256xf32>
    %4 = vector.broadcast %3 : vector<1x256xf32> to vector<8x256xf32>
    %5 = arith.addf %2, %4 : vector<8x256xf32>
    %6 = vector.extract_strided_slice %5 {offsets = [0, 0], sizes = [8, 128], strides = [1, 1]} : vector<8x256xf32> to vector<8x128xf32>
    %c0_5 = arith.constant 0 : index
    %c0_6 = arith.constant 0 : index
    %7 = vector.load %arg4[%c0_5, %c0_6] : memref<1x256xf32, #tpu.memory_space<vmem>>, vector<1x128xf32>
    %c0_7 = arith.constant 0 : index
    %c0_8 = arith.constant 0 : index
    %8 = vector.load %arg5[%c0_7, %c0_8] : memref<1x256xf32, #tpu.memory_space<vmem>>, vector<1x128xf32>
    %cst_9 = arith.constant dense<0.000000e+00> : vector<8xf32>
    %9 = vector.multi_reduction <add>, %6, %cst_9 [1] : vector<8x128xf32> to vector<8xf32>
    %10 = vector.shape_cast %9 : vector<8xf32> to vector<8x1xf32>
    %cst_10 = arith.constant 3.125000e-02 : f32
    %11 = vector.broadcast %cst_10 : f32 to vector<8x1xf32>
    %12 = arith.mulf %10, %11 : vector<8x1xf32>
    %13 = vector.broadcast %12 : vector<8x1xf32> to vector<8x128xf32>
    %14 = arith.subf %6, %13 : vector<8x128xf32>
    %15 = arith.mulf %14, %14 : vector<8x128xf32>
    %cst_11 = arith.constant dense<0.000000e+00> : vector<8xf32>
    %16 = vector.multi_reduction <add>, %15, %cst_11 [1] : vector<8x128xf32> to vector<8xf32>
    %17 = vector.shape_cast %16 : vector<8xf32> to vector<8x1xf32>
    %18 = arith.mulf %12, %12 : vector<8x1xf32>
    %cst_12 = arith.constant 9.600000e+01 : f32
    %19 = vector.broadcast %cst_12 : f32 to vector<8x1xf32>
    %20 = arith.mulf %19, %18 : vector<8x1xf32>
    %21 = arith.subf %17, %20 : vector<8x1xf32>
    %cst_13 = arith.constant 3.125000e-02 : f32
    %22 = vector.broadcast %cst_13 : f32 to vector<8x1xf32>
    %23 = arith.mulf %21, %22 : vector<8x1xf32>
    %cst_14 = arith.constant 9.99999974E-6 : f32
    %24 = vector.broadcast %cst_14 : f32 to vector<8x1xf32>
    %25 = arith.addf %23, %24 : vector<8x1xf32>
    %26 = math.rsqrt %25 : vector<8x1xf32>
    %27 = vector.broadcast %26 : vector<8x1xf32> to vector<8x128xf32>
    %28 = arith.mulf %14, %27 : vector<8x128xf32>
    %29 = vector.broadcast %7 : vector<1x128xf32> to vector<8x128xf32>
    %30 = arith.mulf %28, %29 : vector<8x128xf32>
    %31 = vector.broadcast %8 : vector<1x128xf32> to vector<8x128xf32>
    %32 = arith.addf %30, %31 : vector<8x128xf32>
    %cst_15 = arith.constant 0.000000e+00 : f32
    %33 = vector.broadcast %cst_15 : f32 to vector<8x128xf32>
    %34 = arith.maximumf %32, %33 : vector<8x128xf32>
    %c0_16 = arith.constant 0 : index
    %c0_17 = arith.constant 0 : index
    %c0_18 = arith.constant 0 : index
    %35 = vector.load %arg6[%c0_16, %c0_17, %c0_18] : memref<2x128x128xf32, #tpu.memory_space<vmem>>, vector<1x128x128xf32>
    %36 = vector.shape_cast %35 : vector<1x128x128xf32> to vector<128x128xf32>
    %cst_19 = arith.constant dense<0.000000e+00> : vector<8x128xf32>
    %37 = tpu.matmul %34, %36, %cst_19 {dimension_numbers = #tpu.dot_dimension_numbers<[1], [0], [0], [1], [0, 0, 1, 1], [], []>} : vector<8x128xf32>, vector<128x128xf32>, vector<8x128xf32> -> vector<8x128xf32>
    %c0_20 = arith.constant 0 : index
    %c0_21 = arith.constant 0 : index
    %38 = vector.load %arg7[%c0_20, %c0_21] : memref<1x256xf32, #tpu.memory_space<vmem>>, vector<1x128xf32>
    %39 = vector.broadcast %38 : vector<1x128xf32> to vector<8x128xf32>
    %40 = arith.addf %37, %39 : vector<8x128xf32>
    %c0_22 = arith.constant 0 : index
    %c0_23 = arith.constant 0 : index
    %41 = vector.load %arg8[%c0_22, %c0_23] : memref<1x256xf32, #tpu.memory_space<vmem>>, vector<1x128xf32>
    %c0_24 = arith.constant 0 : index
    %c0_25 = arith.constant 0 : index
    %42 = vector.load %arg9[%c0_24, %c0_25] : memref<1x256xf32, #tpu.memory_space<vmem>>, vector<1x128xf32>
    %cst_26 = arith.constant dense<0.000000e+00> : vector<8xf32>
    %43 = vector.multi_reduction <add>, %40, %cst_26 [1] : vector<8x128xf32> to vector<8xf32>
    %44 = vector.shape_cast %43 : vector<8xf32> to vector<8x1xf32>
    %cst_27 = arith.constant 6.250000e-02 : f32
    %45 = vector.broadcast %cst_27 : f32 to vector<8x1xf32>
    %46 = arith.mulf %44, %45 : vector<8x1xf32>
    %47 = vector.broadcast %46 : vector<8x1xf32> to vector<8x128xf32>
    %48 = arith.subf %40, %47 : vector<8x128xf32>
    %49 = arith.mulf %48, %48 : vector<8x128xf32>
    %cst_28 = arith.constant dense<0.000000e+00> : vector<8xf32>
    %50 = vector.multi_reduction <add>, %49, %cst_28 [1] : vector<8x128xf32> to vector<8xf32>
    %51 = vector.shape_cast %50 : vector<8xf32> to vector<8x1xf32>
    %52 = arith.mulf %46, %46 : vector<8x1xf32>
    %cst_29 = arith.constant 1.120000e+02 : f32
    %53 = vector.broadcast %cst_29 : f32 to vector<8x1xf32>
    %54 = arith.mulf %53, %52 : vector<8x1xf32>
    %55 = arith.subf %51, %54 : vector<8x1xf32>
    %cst_30 = arith.constant 6.250000e-02 : f32
    %56 = vector.broadcast %cst_30 : f32 to vector<8x1xf32>
    %57 = arith.mulf %55, %56 : vector<8x1xf32>
    %cst_31 = arith.constant 9.99999974E-6 : f32
    %58 = vector.broadcast %cst_31 : f32 to vector<8x1xf32>
    %59 = arith.addf %57, %58 : vector<8x1xf32>
    %60 = math.rsqrt %59 : vector<8x1xf32>
    %61 = vector.broadcast %60 : vector<8x1xf32> to vector<8x128xf32>
    %62 = arith.mulf %48, %61 : vector<8x128xf32>
    %63 = vector.broadcast %41 : vector<1x128xf32> to vector<8x128xf32>
    %64 = arith.mulf %62, %63 : vector<8x128xf32>
    %65 = vector.broadcast %42 : vector<1x128xf32> to vector<8x128xf32>
    %66 = arith.addf %64, %65 : vector<8x128xf32>
    %67 = arith.mulf %66, %66 : vector<8x128xf32>
    %cst_32 = arith.constant dense<0.000000e+00> : vector<8xf32>
    %68 = vector.multi_reduction <add>, %67, %cst_32 [1] : vector<8x128xf32> to vector<8xf32>
    %69 = vector.shape_cast %68 : vector<8xf32> to vector<8x1xf32>
    %cst_33 = arith.constant 1.000000e-24 : f32
    %70 = vector.broadcast %cst_33 : f32 to vector<8x1xf32>
    %71 = arith.maximumf %69, %70 : vector<8x1xf32>
    %72 = math.rsqrt %71 : vector<8x1xf32>
    %73 = vector.broadcast %72 : vector<8x1xf32> to vector<8x128xf32>
    %74 = arith.mulf %66, %73 : vector<8x128xf32>
    %75 = vector.extract_strided_slice %74 {offsets = [0, 0], sizes = [8, 16], strides = [1, 1]} : vector<8x128xf32> to vector<8x16xf32>
    %c0_34 = arith.constant 0 : index
    %c0_35 = arith.constant 0 : index
    %76 = vector.load %arg10[%c0_34, %c0_35] : memref<8x16xf32, #tpu.memory_space<vmem>>, vector<8x16xf32>
    tpu.vector_store %arg10[%c0_34, %c0_35], %75 {strides = array<i32>} : memref<8x16xf32, #tpu.memory_space<vmem>>, vector<8x16xf32>,
    %77 = vector.extract_strided_slice %5 {offsets = [0, 128], sizes = [8, 128], strides = [1, 1]} : vector<8x256xf32> to vector<8x128xf32>
    %c0_36 = arith.constant 0 : index
    %c128 = arith.constant 128 : index
    %78 = vector.load %arg4[%c0_36, %c128] : memref<1x256xf32, #tpu.memory_space<vmem>>, vector<1x128xf32>
    %c0_37 = arith.constant 0 : index
    %c128_38 = arith.constant 128 : index
    %79 = vector.load %arg5[%c0_37, %c128_38] : memref<1x256xf32, #tpu.memory_space<vmem>>, vector<1x128xf32>
    %cst_39 = arith.constant dense<0.000000e+00> : vector<8xf32>
    %80 = vector.multi_reduction <add>, %77, %cst_39 [1] : vector<8x128xf32> to vector<8xf32>
    %81 = vector.shape_cast %80 : vector<8xf32> to vector<8x1xf32>
    %cst_40 = arith.constant 3.125000e-02 : f32
    %82 = vector.broadcast %cst_40 : f32 to vector<8x1xf32>
    %83 = arith.mulf %81, %82 : vector<8x1xf32>
    %84 = vector.broadcast %83 : vector<8x1xf32> to vector<8x128xf32>
    %85 = arith.subf %77, %84 : vector<8x128xf32>
    %86 = arith.mulf %85, %85 : vector<8x128xf32>
    %cst_41 = arith.constant dense<0.000000e+00> : vector<8xf32>
    %87 = vector.multi_reduction <add>, %86, %cst_41 [1] : vector<8x128xf32> to vector<8xf32>
    %88 = vector.shape_cast %87 : vector<8xf32> to vector<8x1xf32>
    %89 = arith.mulf %83, %83 : vector<8x1xf32>
    %cst_42 = arith.constant 9.600000e+01 : f32
    %90 = vector.broadcast %cst_42 : f32 to vector<8x1xf32>
    %91 = arith.mulf %90, %89 : vector<8x1xf32>
    %92 = arith.subf %88, %91 : vector<8x1xf32>
    %cst_43 = arith.constant 3.125000e-02 : f32
    %93 = vector.broadcast %cst_43 : f32 to vector<8x1xf32>
    %94 = arith.mulf %92, %93 : vector<8x1xf32>
    %cst_44 = arith.constant 9.99999974E-6 : f32
    %95 = vector.broadcast %cst_44 : f32 to vector<8x1xf32>
    %96 = arith.addf %94, %95 : vector<8x1xf32>
    %97 = math.rsqrt %96 : vector<8x1xf32>
    %98 = vector.broadcast %97 : vector<8x1xf32> to vector<8x128xf32>
    %99 = arith.mulf %85, %98 : vector<8x128xf32>
    %100 = vector.broadcast %78 : vector<1x128xf32> to vector<8x128xf32>
    %101 = arith.mulf %99, %100 : vector<8x128xf32>
    %102 = vector.broadcast %79 : vector<1x128xf32> to vector<8x128xf32>
    %103 = arith.addf %101, %102 : vector<8x128xf32>
    %cst_45 = arith.constant 0.000000e+00 : f32
    %104 = vector.broadcast %cst_45 : f32 to vector<8x128xf32>
    %105 = arith.maximumf %103, %104 : vector<8x128xf32>
    %c1 = arith.constant 1 : index
    %c0_46 = arith.constant 0 : index
    %c0_47 = arith.constant 0 : index
    %106 = vector.load %arg6[%c1, %c0_46, %c0_47] : memref<2x128x128xf32, #tpu.memory_space<vmem>>, vector<1x128x128xf32>
    %107 = vector.shape_cast %106 : vector<1x128x128xf32> to vector<128x128xf32>
    %cst_48 = arith.constant dense<0.000000e+00> : vector<8x128xf32>
    %108 = tpu.matmul %105, %107, %cst_48 {dimension_numbers = #tpu.dot_dimension_numbers<[1], [0], [0], [1], [0, 0, 1, 1], [], []>} : vector<8x128xf32>, vector<128x128xf32>, vector<8x128xf32> -> vector<8x128xf32>
    %c0_49 = arith.constant 0 : index
    %c128_50 = arith.constant 128 : index
    %109 = vector.load %arg7[%c0_49, %c128_50] : memref<1x256xf32, #tpu.memory_space<vmem>>, vector<1x128xf32>
    %110 = vector.broadcast %109 : vector<1x128xf32> to vector<8x128xf32>
    %111 = arith.addf %108, %110 : vector<8x128xf32>
    %c0_51 = arith.constant 0 : index
    %c128_52 = arith.constant 128 : index
    %112 = vector.load %arg8[%c0_51, %c128_52] : memref<1x256xf32, #tpu.memory_space<vmem>>, vector<1x128xf32>
    %c0_53 = arith.constant 0 : index
    %c128_54 = arith.constant 128 : index
    %113 = vector.load %arg9[%c0_53, %c128_54] : memref<1x256xf32, #tpu.memory_space<vmem>>, vector<1x128xf32>
    %cst_55 = arith.constant dense<0.000000e+00> : vector<8xf32>
    %114 = vector.multi_reduction <add>, %111, %cst_55 [1] : vector<8x128xf32> to vector<8xf32>
    %115 = vector.shape_cast %114 : vector<8xf32> to vector<8x1xf32>
    %cst_56 = arith.constant 6.250000e-02 : f32
    %116 = vector.broadcast %cst_56 : f32 to vector<8x1xf32>
    %117 = arith.mulf %115, %116 : vector<8x1xf32>
    %118 = vector.broadcast %117 : vector<8x1xf32> to vector<8x128xf32>
    %119 = arith.subf %111, %118 : vector<8x128xf32>
    %120 = arith.mulf %119, %119 : vector<8x128xf32>
    %cst_57 = arith.constant dense<0.000000e+00> : vector<8xf32>
    %121 = vector.multi_reduction <add>, %120, %cst_57 [1] : vector<8x128xf32> to vector<8xf32>
    %122 = vector.shape_cast %121 : vector<8xf32> to vector<8x1xf32>
    %123 = arith.mulf %117, %117 : vector<8x1xf32>
    %cst_58 = arith.constant 1.120000e+02 : f32
    %124 = vector.broadcast %cst_58 : f32 to vector<8x1xf32>
    %125 = arith.mulf %124, %123 : vector<8x1xf32>
    %126 = arith.subf %122, %125 : vector<8x1xf32>
    %cst_59 = arith.constant 6.250000e-02 : f32
    %127 = vector.broadcast %cst_59 : f32 to vector<8x1xf32>
    %128 = arith.mulf %126, %127 : vector<8x1xf32>
    %cst_60 = arith.constant 9.99999974E-6 : f32
    %129 = vector.broadcast %cst_60 : f32 to vector<8x1xf32>
    %130 = arith.addf %128, %129 : vector<8x1xf32>
    %131 = math.rsqrt %130 : vector<8x1xf32>
    %132 = vector.broadcast %131 : vector<8x1xf32> to vector<8x128xf32>
    %133 = arith.mulf %119, %132 : vector<8x128xf32>
    %134 = vector.broadcast %112 : vector<1x128xf32> to vector<8x128xf32>
    %135 = arith.mulf %133, %134 : vector<8x128xf32>
    %136 = vector.broadcast %113 : vector<1x128xf32> to vector<8x128xf32>
    %137 = arith.addf %135, %136 : vector<8x128xf32>
    %138 = arith.mulf %137, %137 : vector<8x128xf32>
    %cst_61 = arith.constant dense<0.000000e+00> : vector<8xf32>
    %139 = vector.multi_reduction <add>, %138, %cst_61 [1] : vector<8x128xf32> to vector<8xf32>
    %140 = vector.shape_cast %139 : vector<8xf32> to vector<8x1xf32>
    %cst_62 = arith.constant 1.000000e-24 : f32
    %141 = vector.broadcast %cst_62 : f32 to vector<8x1xf32>
    %142 = arith.maximumf %140, %141 : vector<8x1xf32>
    %143 = math.rsqrt %142 : vector<8x1xf32>
    %144 = vector.broadcast %143 : vector<8x1xf32> to vector<8x128xf32>
    %145 = arith.mulf %137, %144 : vector<8x128xf32>
    %146 = vector.extract_strided_slice %145 {offsets = [0, 0], sizes = [8, 16], strides = [1, 1]} : vector<8x128xf32> to vector<8x16xf32>
    %c0_63 = arith.constant 0 : index
    %c0_64 = arith.constant 0 : index
    %147 = vector.load %arg11[%c0_63, %c0_64] : memref<8x16xf32, #tpu.memory_space<vmem>>, vector<8x16xf32>
    tpu.vector_store %arg11[%c0_63, %c0_64], %146 {strides = array<i32>} : memref<8x16xf32, #tpu.memory_space<vmem>>, vector<8x16xf32>,
    return
  }
  func.func @transform_0(%arg0: i32) -> (i32, i32) {
    %c0_i32 = arith.constant 0 : i32
    %c0_i32_0 = arith.constant 0 : i32
    return %arg0, %c0_i32 : i32, i32
  }
  func.func @transform_1(%arg0: i32) -> (i32, i32) {
    %c0_i32 = arith.constant 0 : i32
    %c0_i32_0 = arith.constant 0 : i32
    %c0_i32_1 = arith.constant 0 : i32
    return %c0_i32, %c0_i32_0 : i32, i32
  }
  func.func @transform_2(%arg0: i32) -> (i32, i32) {
    %c0_i32 = arith.constant 0 : i32
    %c0_i32_0 = arith.constant 0 : i32
    %c0_i32_1 = arith.constant 0 : i32
    return %c0_i32, %c0_i32_0 : i32, i32
  }
  func.func @transform_3(%arg0: i32) -> (i32, i32) {
    %c0_i32 = arith.constant 0 : i32
    %c0_i32_0 = arith.constant 0 : i32
    %c0_i32_1 = arith.constant 0 : i32
    return %c0_i32, %c0_i32_0 : i32, i32
  }
  func.func @transform_4(%arg0: i32) -> (i32, i32) {
    %c0_i32 = arith.constant 0 : i32
    %c0_i32_0 = arith.constant 0 : i32
    %c0_i32_1 = arith.constant 0 : i32
    return %c0_i32, %c0_i32_0 : i32, i32
  }
  func.func @transform_5(%arg0: i32) -> (i32, i32, i32) {
    %c0_i32 = arith.constant 0 : i32
    %c0_i32_0 = arith.constant 0 : i32
    %c0_i32_1 = arith.constant 0 : i32
    %c0_i32_2 = arith.constant 0 : i32
    return %c0_i32, %c0_i32_0, %c0_i32_1 : i32, i32, i32
  }
  func.func @transform_6(%arg0: i32) -> (i32, i32) {
    %c0_i32 = arith.constant 0 : i32
    %c0_i32_0 = arith.constant 0 : i32
    %c0_i32_1 = arith.constant 0 : i32
    return %c0_i32, %c0_i32_0 : i32, i32
  }
  func.func @transform_7(%arg0: i32) -> (i32, i32) {
    %c0_i32 = arith.constant 0 : i32
    %c0_i32_0 = arith.constant 0 : i32
    %c0_i32_1 = arith.constant 0 : i32
    return %c0_i32, %c0_i32_0 : i32, i32
  }
  func.func @transform_8(%arg0: i32) -> (i32, i32) {
    %c0_i32 = arith.constant 0 : i32
    %c0_i32_0 = arith.constant 0 : i32
    %c0_i32_1 = arith.constant 0 : i32
    return %c0_i32, %c0_i32_0 : i32, i32
  }
  func.func @transform_9(%arg0: i32) -> (i32, i32) {
    %c0_i32 = arith.constant 0 : i32
    %c0_i32_0 = arith.constant 0 : i32
    return %arg0, %c0_i32 : i32, i32
  }
  func.func @transform_10(%arg0: i32) -> (i32, i32) {
    %c0_i32 = arith.constant 0 : i32
    %c0_i32_0 = arith.constant 0 : i32
    return %arg0, %c0_i32 : i32, i32
  }
}

</mosaic_0001>

<llo_original>
// kernel: branch_representation_encoder.1
$region0: #{branch_representation_encoder.1}
  #allocation0 [shape = 'u32[]', space=smem, size = 0x4, offset = 0x4, fixed_abs, tag = 'smem constant byte address 0x4 - core index']
  #allocation1 [shape = 'u32[144,128]{1,0:T(1,128)}', space=vmem, size = 0x12000, scoped, tag = 'internal scratch']
  %s0 = inlined_call_operand.vmem [shape: f32[8,32], index: 0, kind: input, shape index: {}]
  %s1 = inlined_call_operand.vmem [shape: f32[32,256], index: 1, kind: input, shape index: {}]
  %s2 = inlined_call_operand.vmem [shape: f32[1,256], index: 2, kind: input, shape index: {}]
  %s3 = inlined_call_operand.vmem [shape: f32[1,256], index: 3, kind: input, shape index: {}]
  %s4 = inlined_call_operand.vmem [shape: f32[1,256], index: 4, kind: input, shape index: {}]
  %s5 = inlined_call_operand.vmem [shape: f32[2,128,128], index: 5, kind: input, shape index: {}]
  %s6 = inlined_call_operand.vmem [shape: f32[1,256], index: 6, kind: input, shape index: {}]
  %s7 = inlined_call_operand.vmem [shape: f32[1,256], index: 7, kind: input, shape index: {}]
  %s8 = inlined_call_operand.vmem [shape: f32[1,256], index: 8, kind: input, shape index: {}]
  %s9 = inlined_call_operand.hbm [shape: f32[8,16], index: 9, kind: output, shape index: {0}]
  %s10 = inlined_call_operand.hbm [shape: f32[8,16], index: 10, kind: output, shape index: {1}]
  %11 = xla_tuple %s9, %s10
  %s12 = sld [smem:[#allocation0]]
  $region54: #{branch_representation_encoder.1} parent=0
    _
  %s14 = ssub.s32 1, %s12
  %s15 = scalar_select 0, %s14, %s12
  $region1: #{branch_representation_encoder.1} parent=0
    #allocation2 [shape = 'u8[4096]{0}', space=vmem, size = 0x1000, scoped, tag = 'output window, operand 0, single buffered']
    #allocation3 [shape = 's32[1]{0}', space=sflag, size = 0x4, scoped, tag = 'scoped memory for branch_representation_encoder.1']
    #allocation4 [shape = 'u8[4096]{0}', space=vmem, size = 0x1000, scoped, tag = 'output window, operand 1, single buffered']
    #allocation5 [shape = 's32[1]{0}', space=sflag, size = 0x4, scoped, tag = 'scoped memory for branch_representation_encoder.1']
    %16 = vsyncpa [#allocation3], 0
    %17 = vsyncpa [#allocation5], 0
    // Predicated region
    $region2: #{branch_representation_encoder.1} parent=1 // pred_check
      _
    $region3: #{branch_representation_encoder.1} parent=1 // pred_check_branch
      %19 = sbr.rel (0) target = $region5
    $region4: #{branch_representation_encoder.1} parent=1 // pred_region
      _
    $region5: #{branch_representation_encoder.1} parent=1 // pred_fallthru
      _
    // Predicated region
    $region6: #{branch_representation_encoder.1} parent=1 // pred_check
      _
    $region7: #{branch_representation_encoder.1} parent=1 // pred_check_branch
      %21 = sbr.rel (0) target = $region9
    $region8: #{branch_representation_encoder.1} parent=1 // pred_region
      _
    $region9: #{branch_representation_encoder.1} parent=1 // pred_fallthru
      _
    // Predicated region
    $region10: #{branch_representation_encoder.1} parent=1 // pred_check
      _
    $region11: #{branch_representation_encoder.1} parent=1 // pred_check_branch
      %23 = sbr.rel (0) target = $region13
    $region12: #{branch_representation_encoder.1} parent=1 // pred_region
      _
    $region13: #{branch_representation_encoder.1} parent=1 // pred_fallthru
      _
    // Predicated region
    $region14: #{branch_representation_encoder.1} parent=1 // pred_check
      _
    $region15: #{branch_representation_encoder.1} parent=1 // pred_check_branch
      %25 = sbr.rel (0) target = $region17
    $region16: #{branch_representation_encoder.1} parent=1 // pred_region
      _
    $region17: #{branch_representation_encoder.1} parent=1 // pred_fallthru
      _
    // Predicated region
    $region18: #{branch_representation_encoder.1} parent=1 // pred_check
      _
    $region19: #{branch_representation_encoder.1} parent=1 // pred_check_branch
      %27 = sbr.rel (0) target = $region21
    $region20: #{branch_representation_encoder.1} parent=1 // pred_region
      _
    $region21: #{branch_representation_encoder.1} parent=1 // pred_fallthru
      _
    // Predicated region
    $region22: #{branch_representation_encoder.1} parent=1 // pred_check
      _
    $region23: #{branch_representation_encoder.1} parent=1 // pred_check_branch
      %29 = sbr.rel (0) target = $region25
    $region24: #{branch_representation_encoder.1} parent=1 // pred_region
      _
    $region25: #{branch_representation_encoder.1} parent=1 // pred_fallthru
      _
    // Predicated region
    $region26: #{branch_representation_encoder.1} parent=1 // pred_check
      _
    $region27: #{branch_representation_encoder.1} parent=1 // pred_check_branch
      %31 = sbr.rel (0) target = $region29
    $region28: #{branch_representation_encoder.1} parent=1 // pred_region
      _
    $region29: #{branch_representation_encoder.1} parent=1 // pred_fallthru
      _
    // Predicated region
    $region30: #{branch_representation_encoder.1} parent=1 // pred_check
      _
    $region31: #{branch_representation_encoder.1} parent=1 // pred_check_branch
      %33 = sbr.rel (0) target = $region33
    $region32: #{branch_representation_encoder.1} parent=1 // pred_region
      _
    $region33: #{branch_representation_encoder.1} parent=1 // pred_fallthru
      _
    // Predicated region
    $region34: #{branch_representation_encoder.1} parent=1 // pred_check
      _
    $region35: #{branch_representation_encoder.1} parent=1 // pred_check_branch
      %35 = sbr.rel (0) target = $region37
    $region36: #{branch_representation_encoder.1} parent=1 // pred_region
      _
    $region37: #{branch_representation_encoder.1} parent=1 // pred_fallthru
      _
    %v36 = vld [vmem:[%s0] sm:$0xff]
    %v37 = vld [vmem:[%s1] sm:$0xff]
    %v38 = vld [vmem:[%s1 + $0x8] sm:$0xff]
    %v39 = vld [vmem:[%s1 + $0x10] sm:$0xff]
    %v40 = vld [vmem:[%s1 + $0x18] sm:$0xff]
    %v41 = vld [vmem:[%s1 + $0x20] sm:$0xff]
    %v42 = vld [vmem:[%s1 + $0x28] sm:$0xff]
    %v43 = vld [vmem:[%s1 + $0x30] sm:$0xff]
    %v44 = vld [vmem:[%s1 + $0x38] sm:$0xff]
    %v45 = vld [vmem:[%s2] sm:$0x3]
    %v47 = vlaneseq
    %v48 = vshrl.u32 %v47, 7
    %v49 = vsub.s32 0, %v48
    %v50 = vrot.slane %v45, %v49
    %v51 = vlaneseq
    %v52 = vshrl.u32 %v51, 7
    %v53 = vsub.s32 1, %v52
    %v54 = vrot.slane %v45, %v53
    %vm57 = vcmask 261120
    %v59 = vsel %vm57, %v36, 0
    %61 = vmatprep.subr.mxu0 0.0
    %62 = vmatpush1.msra.mxu0 0.0
    %63 = vmatprep.subr.mxu0 0.0
    %64 = vmatpush1.msra.mxu0 0.0
    %65 = vmatprep.subr.mxu0 0.0
    %66 = vmatpush1.msra.mxu0 0.0
    %67 = vmatprep.subr.mxu0 0.0
    %68 = vmatpush1.msra.mxu0 0.0
    %69 = vmatprep.subr.mxu0 0.0
    %70 = vmatpush1.msra.mxu0 0.0
    %71 = vmatprep.subr.mxu0 0.0
    %72 = vmatpush1.msra.mxu0 0.0
    %73 = vmatprep.subr.mxu0 0.0
    %74 = vmatpush1.msra.mxu0 0.0
    %75 = vmatprep.subr.mxu0 0.0
    %76 = vmatpush1.msra.mxu0 0.0
    %77 = vmatprep.subr.mxu0 0.0
    %78 = vmatpush1.msra.mxu0 0.0
    %79 = vmatprep.subr.mxu0 0.0
    %80 = vmatpush1.msra.mxu0 0.0
    %81 = vmatprep.subr.mxu0 0.0
    %82 = vmatpush1.msra.mxu0 0.0
    %83 = vmatprep.subr.mxu0 0.0
    %84 = vmatpush1.msra.mxu0 0.0
    %85 = vmatprep.subr.mxu0 %v44
    %86 = vmatpush1.msra.mxu0 %v43
    %87 = vmatprep.subr.mxu0 %v42
    %88 = vmatpush1.msra.mxu0 %v41
    %89 = vmatprep.subr.mxu0 %v40
    %90 = vmatpush1.msra.mxu0 %v39
    %91 = vmatprep.subr.mxu0 %v38
    %92 = vmatpush1.msra.mxu0 %v37
    %93 = vmatprep.subr.mxu0 0.0
    %94 = vmatpush2.msra.mxu0 0.0
    %95 = vmatprep.subr.mxu0 0.0
    %96 = vmatpush2.msra.mxu0 0.0
    %97 = vmatprep.subr.mxu0 0.0
    %98 = vmatpush2.msra.mxu0 0.0
    %99 = vmatprep.subr.mxu0 0.0
    %100 = vmatpush2.msra.mxu0 0.0
    %101 = vmatprep.subr.mxu0 0.0
    %102 = vmatpush2.msra.mxu0 0.0
    %103 = vmatprep.subr.mxu0 0.0
    %104 = vmatpush2.msra.mxu0 0.0
    %105 = vmatprep.subr.mxu0 0.0
    %106 = vmatpush2.msra.mxu0 0.0
    %107 = vmatprep.subr.mxu0 0.0
    %108 = vmatpush2.msra.mxu0 0.0
    %109 = vmatprep.subr.mxu0 0.0
    %110 = vmatpush2.msra.mxu0 0.0
    %111 = vmatprep.subr.mxu0 0.0
    %112 = vmatpush2.msra.mxu0 0.0
    %113 = vmatprep.subr.mxu0 0.0
    %114 = vmatpush2.msra.mxu0 0.0
    %115 = vmatprep.subr.mxu0 0.0
    %116 = vmatpush2.msra.mxu0 0.0
    %117 = vmatprep.subr.mxu0 0.0
    %118 = vmatpush2.msra.mxu0 0.0
    %119 = vmatprep.subr.mxu0 0.0
    %120 = vmatpush2.msra.mxu0 0.0
    %121 = vmatprep.subr.mxu0 0.0
    %122 = vmatpush2.msra.mxu0 0.0
    %123 = vmatprep.subr.mxu0 0.0
    %124 = vmatpush2.msra.mxu0 0.0
    %125 = vmatprep.mubr.f32.mxu0 0.0
    %126 = vmatmul.mubr.f32.gmra.mxu0 %v59
    %v127 = vpop.f32.mrf.mxu0
    %v128 = vadd.f32 %v50, %v127
    %v129 = vpop.f32.mrf.mxu0
    %v130 = vadd.f32 %v54, %v129
    %131 = vdwg.mxu0
    %v132 = vld [vmem:[%s3] sm:$0x1]
    %v133 = vld [vmem:[%s4] sm:$0x1]
    %134 = vadd.xlane.f32.xlu0 %v128
    %v135 = vpop.xlane.xlu0 %134
    %v136 = vmul.f32 %v135, 0.03125
    %v137 = vsub.f32 %v128, %v136
    %v138 = vmul.f32 %v137, %v137
    %139 = vadd.xlane.f32.xlu0 %v138
    %v140 = vpop.xlane.xlu0 %139
    %v141 = vmul.f32 %v136, %v136
    %v142 = vmul.f32 %v141, 96.0
    %v143 = vsub.f32 %v140, %v142
    %v144 = vmul.f32 %v143, 0.03125
    %v145 = vadd.f32 %v144, 1e-05
    %v146 = vrsqrt.pop %v145
    %v147 = vmul.f32 %v137, %v146
    %v149 = vlaneseq
    %v150 = vshrl.u32 %v149, 7
    %v151 = vsub.s32 0, %v150
    %v152 = vrot.slane %v132, %v151
    %v154 = vmul.f32 %v147, %v152
    %v156 = vlaneseq
    %v157 = vshrl.u32 %v156, 7
    %v158 = vsub.s32 0, %v157
    %v159 = vrot.slane %v133, %v158
    %v161 = vadd.f32 %v154, %v159
    %v162 = vmax.f32 %v161, 0.0
    %v163 = vld [vmem:[%s5] sm:$0xff]
    %v164 = vld [vmem:[%s5 + $0x8] sm:$0xff]
    %v165 = vld [vmem:[%s5 + $0x10] sm:$0xff]
    %v166 = vld [vmem:[%s5 + $0x18] sm:$0xff]
    %v167 = vld [vmem:[%s5 + $0x20] sm:$0xff]
    %v168 = vld [vmem:[%s5 + $0x28] sm:$0xff]
    %v169 = vld [vmem:[%s5 + $0x30] sm:$0xff]
    %v170 = vld [vmem:[%s5 + $0x38] sm:$0xff]
    %v171 = vld [vmem:[%s5 + $0x40] sm:$0xff]
    %v172 = vld [vmem:[%s5 + $0x48] sm:$0xff]
    %v173 = vld [vmem:[%s5 + $0x50] sm:$0xff]
    %v174 = vld [vmem:[%s5 + $0x58] sm:$0xff]
    %v175 = vld [vmem:[%s5 + $0x60] sm:$0xff]
    %v176 = vld [vmem:[%s5 + $0x68] sm:$0xff]
    %v177 = vld [vmem:[%s5 + $0x70] sm:$0xff]
    %v178 = vld [vmem:[%s5 + $0x78] sm:$0xff]
    %v179 = vld [vmem:[%s6] sm:$0x1]
    %v181 = vlaneseq
    %v182 = vshrl.u32 %v181, 7
    %v183 = vsub.s32 0, %v182
    %v184 = vrot.slane %v179, %v183
    %186 = vmatprep.subr.mxu0 0.0
    %187 = vmatpush1.msra.mxu0 %v178
    %188 = vmatprep.subr.mxu0 0.0
    %189 = vmatpush1.msra.mxu0 %v177
    %190 = vmatprep.subr.mxu0 0.0
    %191 = vmatpush1.msra.mxu0 %v176
    %192 = vmatprep.subr.mxu0 0.0
    %193 = vmatpush1.msra.mxu0 %v175
    %194 = vmatprep.subr.mxu0 0.0
    %195 = vmatpush1.msra.mxu0 %v174
    %196 = vmatprep.subr.mxu0 0.0
    %197 = vmatpush1.msra.mxu0 %v173
    %198 = vmatprep.subr.mxu0 0.0
    %199 = vmatpush1.msra.mxu0 %v172
    %200 = vmatprep.subr.mxu0 0.0
    %201 = vmatpush1.msra.mxu0 %v171
    %202 = vmatprep.subr.mxu0 0.0
    %203 = vmatpush1.msra.mxu0 %v170
    %204 = vmatprep.subr.mxu0 0.0
    %205 = vmatpush1.msra.mxu0 %v169
    %206 = vmatprep.subr.mxu0 0.0
    %207 = vmatpush1.msra.mxu0 %v168
    %208 = vmatprep.subr.mxu0 0.0
    %209 = vmatpush1.msra.mxu0 %v167
    %210 = vmatprep.subr.mxu0 0.0
    %211 = vmatpush1.msra.mxu0 %v166
    %212 = vmatprep.subr.mxu0 0.0
    %213 = vmatpush1.msra.mxu0 %v165
    %214 = vmatprep.subr.mxu0 0.0
    %215 = vmatpush1.msra.mxu0 %v164
    %216 = vmatprep.subr.mxu0 0.0
    %217 = vmatpush1.msra.mxu0 %v163
    %218 = vmatprep.subr.mxu0 0.0
    %219 = vmatpush2.msra.mxu0 0.0
    %220 = vmatprep.subr.mxu0 0.0
    %221 = vmatpush2.msra.mxu0 0.0
    %222 = vmatprep.subr.mxu0 0.0
    %223 = vmatpush2.msra.mxu0 0.0
    %224 = vmatprep.subr.mxu0 0.0
    %225 = vmatpush2.msra.mxu0 0.0
    %226 = vmatprep.subr.mxu0 0.0
    %227 = vmatpush2.msra.mxu0 0.0
    %228 = vmatprep.subr.mxu0 0.0
    %229 = vmatpush2.msra.mxu0 0.0
    %230 = vmatprep.subr.mxu0 0.0
    %231 = vmatpush2.msra.mxu0 0.0
    %232 = vmatprep.subr.mxu0 0.0
    %233 = vmatpush2.msra.mxu0 0.0
    %234 = vmatprep.subr.mxu0 0.0
    %235 = vmatpush2.msra.mxu0 0.0
    %236 = vmatprep.subr.mxu0 0.0
    %237 = vmatpush2.msra.mxu0 0.0
    %238 = vmatprep.subr.mxu0 0.0
    %239 = vmatpush2.msra.mxu0 0.0
    %240 = vmatprep.subr.mxu0 0.0
    %241 = vmatpush2.msra.mxu0 0.0
    %242 = vmatprep.subr.mxu0 0.0
    %243 = vmatpush2.msra.mxu0 0.0
    %244 = vmatprep.subr.mxu0 0.0
    %245 = vmatpush2.msra.mxu0 0.0
    %246 = vmatprep.subr.mxu0 0.0
    %247 = vmatpush2.msra.mxu0 0.0
    %248 = vmatprep.subr.mxu0 0.0
    %249 = vmatpush2.msra.mxu0 0.0
    %250 = vmatprep.mubr.f32.mxu0 0.0
    %251 = vmatmul.mubr.f32.gmra.mxu0 %v162
    %v252 = vpop.f32.mrf.mxu0
    %v253 = vadd.f32 %v184, %v252
    %v254 = vpop.f32.mrf.mxu0
    %255 = vdwg.mxu0
    %v256 = vld [vmem:[%s7] sm:$0x1]
    %v257 = vld [vmem:[%s8] sm:$0x1]
    %258 = vadd.xlane.f32.xlu0 %v253
    %v259 = vpop.xlane.xlu0 %258
    %v260 = vmul.f32 %v259, 0.0625
    %v261 = vsub.f32 %v253, %v260
    %v262 = vmul.f32 %v261, %v261
    %263 = vadd.xlane.f32.xlu0 %v262
    %v264 = vpop.xlane.xlu0 %263
    %v265 = vmul.f32 %v260, %v260
    %v266 = vmul.f32 %v265, 112.0
    %v267 = vsub.f32 %v264, %v266
    %v268 = vmul.f32 %v267, 0.0625
    %v269 = vadd.f32 %v268, 1e-05
    %v270 = vrsqrt.pop %v269
    %v271 = vmul.f32 %v261, %v270
    %v273 = vlaneseq
    %v274 = vshrl.u32 %v273, 7
    %v275 = vsub.s32 0, %v274
    %v276 = vrot.slane %v256, %v275
    %v278 = vmul.f32 %v271, %v276
    %v280 = vlaneseq
    %v281 = vshrl.u32 %v280, 7
    %v282 = vsub.s32 0, %v281
    %v283 = vrot.slane %v257, %v282
    %v285 = vadd.f32 %v278, %v283
    %v286 = vmul.f32 %v285, %v285
    %287 = vadd.xlane.f32.xlu0 %v286
    %v288 = vpop.xlane.xlu0 %287
    %v289 = vmax.f32 %v288, 1e-24
    %v290 = vrsqrt.pop %v289
    %v291 = vmul.f32 %v285, %v290
    %vm292 = vcmask 130048
    %293 = vst.msk [vmem:[#allocation2] sm:$0xff] %vm292, %v291
    %v294 = vld [vmem:[%s3 + $0x1] sm:$0x1]
    %v295 = vld [vmem:[%s4 + $0x1] sm:$0x1]
    %296 = vadd.xlane.f32.xlu0 %v130
    %v297 = vpop.xlane.xlu0 %296
    %v298 = vmul.f32 %v297, 0.03125
    %v299 = vsub.f32 %v130, %v298
    %v300 = vmul.f32 %v299, %v299
    %301 = vadd.xlane.f32.xlu0 %v300
    %v302 = vpop.xlane.xlu0 %301
    %v303 = vmul.f32 %v298, %v298
    %v304 = vmul.f32 %v303, 96.0
    %v305 = vsub.f32 %v302, %v304
    %v306 = vmul.f32 %v305, 0.03125
    %v307 = vadd.f32 %v306, 1e-05
    %v308 = vrsqrt.pop %v307
    %v309 = vmul.f32 %v299, %v308
    %v311 = vlaneseq
    %v312 = vshrl.u32 %v311, 7
    %v313 = vsub.s32 0, %v312
    %v314 = vrot.slane %v294, %v313
    %v316 = vmul.f32 %v309, %v314
    %v318 = vlaneseq
    %v319 = vshrl.u32 %v318, 7
    %v320 = vsub.s32 0, %v319
    %v321 = vrot.slane %v295, %v320
    %v323 = vadd.f32 %v316, %v321
    %v324 = vmax.f32 %v323, 0.0
    %s325 = scalar_lea.vmem %s5, 128
    %v326 = vld [vmem:[%s325] sm:$0xff]
    %v327 = vld [vmem:[%s325 + $0x8] sm:$0xff]
    %v328 = vld [vmem:[%s325 + $0x10] sm:$0xff]
    %v329 = vld [vmem:[%s325 + $0x18] sm:$0xff]
    %v330 = vld [vmem:[%s325 + $0x20] sm:$0xff]
    %v331 = vld [vmem:[%s325 + $0x28] sm:$0xff]
    %v332 = vld [vmem:[%s325 + $0x30] sm:$0xff]
    %v333 = vld [vmem:[%s325 + $0x38] sm:$0xff]
    %v334 = vld [vmem:[%s325 + $0x40] sm:$0xff]
    %v335 = vld [vmem:[%s325 + $0x48] sm:$0xff]
    %v336 = vld [vmem:[%s325 + $0x50] sm:$0xff]
    %v337 = vld [vmem:[%s325 + $0x58] sm:$0xff]
    %v338 = vld [vmem:[%s325 + $0x60] sm:$0xff]
    %v339 = vld [vmem:[%s325 + $0x68] sm:$0xff]
    %v340 = vld [vmem:[%s325 + $0x70] sm:$0xff]
    %v341 = vld [vmem:[%s325 + $0x78] sm:$0xff]
    %v342 = vld [vmem:[%s6 + $0x1] sm:$0x1]
    %v344 = vlaneseq
    %v345 = vshrl.u32 %v344, 7
    %v346 = vsub.s32 0, %v345
    %v347 = vrot.slane %v342, %v346
    %349 = vmatprep.subr.mxu0 0.0
    %350 = vmatpush1.msra.mxu0 %v341
    %351 = vmatprep.subr.mxu0 0.0
    %352 = vmatpush1.msra.mxu0 %v340
    %353 = vmatprep.subr.mxu0 0.0
    %354 = vmatpush1.msra.mxu0 %v339
    %355 = vmatprep.subr.mxu0 0.0
    %356 = vmatpush1.msra.mxu0 %v338
    %357 = vmatprep.subr.mxu0 0.0
    %358 = vmatpush1.msra.mxu0 %v337
    %359 = vmatprep.subr.mxu0 0.0
    %360 = vmatpush1.msra.mxu0 %v336
    %361 = vmatprep.subr.mxu0 0.0
    %362 = vmatpush1.msra.mxu0 %v335
    %363 = vmatprep.subr.mxu0 0.0
    %364 = vmatpush1.msra.mxu0 %v334
    %365 = vmatprep.subr.mxu0 0.0
    %366 = vmatpush1.msra.mxu0 %v333
    %367 = vmatprep.subr.mxu0 0.0
    %368 = vmatpush1.msra.mxu0 %v332
    %369 = vmatprep.subr.mxu0 0.0
    %370 = vmatpush1.msra.mxu0 %v331
    %371 = vmatprep.subr.mxu0 0.0
    %372 = vmatpush1.msra.mxu0 %v330
    %373 = vmatprep.subr.mxu0 0.0
    %374 = vmatpush1.msra.mxu0 %v329
    %375 = vmatprep.subr.mxu0 0.0
    %376 = vmatpush1.msra.mxu0 %v328
    %377 = vmatprep.subr.mxu0 0.0
    %378 = vmatpush1.msra.mxu0 %v327
    %379 = vmatprep.subr.mxu0 0.0
    %380 = vmatpush1.msra.mxu0 %v326
    %381 = vmatprep.subr.mxu0 0.0
    %382 = vmatpush2.msra.mxu0 0.0
    %383 = vmatprep.subr.mxu0 0.0
    %384 = vmatpush2.msra.mxu0 0.0
    %385 = vmatprep.subr.mxu0 0.0
    %386 = vmatpush2.msra.mxu0 0.0
    %387 = vmatprep.subr.mxu0 0.0
    %388 = vmatpush2.msra.mxu0 0.0
    %389 = vmatprep.subr.mxu0 0.0
    %390 = vmatpush2.msra.mxu0 0.0
    %391 = vmatprep.subr.mxu0 0.0
    %392 = vmatpush2.msra.mxu0 0.0
    %393 = vmatprep.subr.mxu0 0.0
    %394 = vmatpush2.msra.mxu0 0.0
    %395 = vmatprep.subr.mxu0 0.0
    %396 = vmatpush2.msra.mxu0 0.0
    %397 = vmatprep.subr.mxu0 0.0
    %398 = vmatpush2.msra.mxu0 0.0
    %399 = vmatprep.subr.mxu0 0.0
    %400 = vmatpush2.msra.mxu0 0.0
    %401 = vmatprep.subr.mxu0 0.0
    %402 = vmatpush2.msra.mxu0 0.0
    %403 = vmatprep.subr.mxu0 0.0
    %404 = vmatpush2.msra.mxu0 0.0
    %405 = vmatprep.subr.mxu0 0.0
    %406 = vmatpush2.msra.mxu0 0.0
    %407 = vmatprep.subr.mxu0 0.0
    %408 = vmatpush2.msra.mxu0 0.0
    %409 = vmatprep.subr.mxu0 0.0
    %410 = vmatpush2.msra.mxu0 0.0
    %411 = vmatprep.subr.mxu0 0.0
    %412 = vmatpush2.msra.mxu0 0.0
    %413 = vmatprep.mubr.f32.mxu0 0.0
    %414 = vmatmul.mubr.f32.gmra.mxu0 %v324
    %v415 = vpop.f32.mrf.mxu0
    %v416 = vadd.f32 %v347, %v415
    %v417 = vpop.f32.mrf.mxu0
    %418 = vdwg.mxu0
    %v419 = vld [vmem:[%s7 + $0x1] sm:$0x1]
    %v420 = vld [vmem:[%s8 + $0x1] sm:$0x1]
    %421 = vadd.xlane.f32.xlu0 %v416
    %v422 = vpop.xlane.xlu0 %421
    %v423 = vmul.f32 %v422, 0.0625
    %v424 = vsub.f32 %v416, %v423
    %v425 = vmul.f32 %v424, %v424
    %426 = vadd.xlane.f32.xlu0 %v425
    %v427 = vpop.xlane.xlu0 %426
    %v428 = vmul.f32 %v423, %v423
    %v429 = vmul.f32 %v428, 112.0
    %v430 = vsub.f32 %v427, %v429
    %v431 = vmul.f32 %v430, 0.0625
    %v432 = vadd.f32 %v431, 1e-05
    %v433 = vrsqrt.pop %v432
    %v434 = vmul.f32 %v424, %v433
    %v436 = vlaneseq
    %v437 = vshrl.u32 %v436, 7
    %v438 = vsub.s32 0, %v437
    %v439 = vrot.slane %v419, %v438
    %v441 = vmul.f32 %v434, %v439
    %v443 = vlaneseq
    %v444 = vshrl.u32 %v443, 7
    %v445 = vsub.s32 0, %v444
    %v446 = vrot.slane %v420, %v445
    %v448 = vadd.f32 %v441, %v446
    %v449 = vmul.f32 %v448, %v448
    %450 = vadd.xlane.f32.xlu0 %v449
    %v451 = vpop.xlane.xlu0 %450
    %v452 = vmax.f32 %v451, 1e-24
    %v453 = vrsqrt.pop %v452
    %v454 = vmul.f32 %v448, %v453
    %455 = vst.msk [vmem:[#allocation4] sm:$0xff] %vm292, %v454
    // Predicated region
    $region38: #{branch_representation_encoder.1} parent=1 // pred_check
      _
    $region39: #{branch_representation_encoder.1} parent=1 // pred_check_branch
      %457 = sbr.rel (0) target = $region41
    $region40: #{branch_representation_encoder.1} parent=1 // pred_region
      %s459 = ssub.s32 128, 128
      %460 = vsyncadd [#allocation3], %s459
      %s462 = sshll.u32 [#allocation2], 4
      %s463 = int_to_ptr.vmem [resolvable:$true] %s462
      %465 = dma.vmem_to_hbm [thread:$0]  %s463, 128, %s9, [#allocation3]
    $region41: #{branch_representation_encoder.1} parent=1 // pred_fallthru
      _
    // Predicated region
    $region42: #{branch_representation_encoder.1} parent=1 // pred_check
      _
    $region43: #{branch_representation_encoder.1} parent=1 // pred_check_branch
      %467 = sbr.rel (0) target = $region45
    $region44: #{branch_representation_encoder.1} parent=1 // pred_region
      %s469 = ssub.s32 128, 128
      %470 = vsyncadd [#allocation5], %s469
      %s472 = sshll.u32 [#allocation4], 4
      %s473 = int_to_ptr.vmem [resolvable:$true] %s472
      %475 = dma.vmem_to_hbm [thread:$0]  %s473, 128, %s10, [#allocation5]
    $region45: #{branch_representation_encoder.1} parent=1 // pred_fallthru
      _
    // Predicated region
    $region46: #{branch_representation_encoder.1} parent=1 // pred_check
      _
    $region47: #{branch_representation_encoder.1} parent=1 // pred_check_branch
      %477 = sbr.rel (0) target = $region49
    $region48: #{branch_representation_encoder.1} parent=1 // pred_region
      %478 = dma.done [#allocation3], 128
    $region49: #{branch_representation_encoder.1} parent=1 // pred_fallthru
      _
    // Predicated region
    $region50: #{branch_representation_encoder.1} parent=1 // pred_check
      _
    $region51: #{branch_representation_encoder.1} parent=1 // pred_check_branch
      %480 = sbr.rel (0) target = $region53
    $region52: #{branch_representation_encoder.1} parent=1 // pred_region
      %481 = dma.done [#allocation5], 128
    $region53: #{branch_representation_encoder.1} parent=1 // pred_fallthru
      _
    %482 = vsyncpa [#allocation3], 1
    %483 = vsyncpa [#allocation5], 1

</llo_original>
